<compile_context>
chip_gen: v7x
topology: tpu7x:2x2x1
jax: 0.10.0
libtpu: 0.0.40
codegen_flags: <defaults>
</compile_context>

<pallas_src>
import functools

import jax
import jax.numpy as jnp
from jax.experimental import pallas as pl
from jax.experimental.pallas import tpu as pltpu


def _round_up(x, m):
    return ((x + m - 1) // m) * m


def _discriminator_kernel(x_ref, w1_ref, b1_ref, w2_ref, b2_ref, w3_ref, b3_ref, o_ref):
    # In-kernel f32 -> bf16 cast of the activations (rides the VPU slot).
    x = x_ref[...].astype(jnp.bfloat16)
    # Layer 1: bf16 MXU matmul, f32 accumulation; bias + ReLU in f32.
    h1 = jnp.dot(x, w1_ref[...], preferred_element_type=jnp.float32) + b1_ref[...]
    h1 = jnp.maximum(h1, 0.0).astype(jnp.bfloat16)
    # Layer 2
    h2 = jnp.dot(h1, w2_ref[...], preferred_element_type=jnp.float32) + b2_ref[...]
    h2 = jnp.maximum(h2, 0.0).astype(jnp.bfloat16)
    # Layer 3: logits, stored unpadded (masked lane store is cheap vs. 16x write bytes).
    o_ref[...] = (
        jnp.dot(h2, w3_ref[...], preferred_element_type=jnp.float32) + b3_ref[...]
    ).astype(o_ref.dtype)


def _pick_batch_tile(B, batch_tile):
    """Multiple of 8, clamped to the batch; keep the grid >= 2 tiles for v7x megacore."""
    bt = min(batch_tile, _round_up(B, 8))
    bt = max(8, _round_up(bt, 8))
    if pl.cdiv(B, bt) < 2 and B > 256:
        # Split across both TensorCores on v7x instead of collapsing to a single tile.
        bt = _round_up(pl.cdiv(B, 2), 128)
    return bt


@functools.partial(jax.jit, static_argnames=("batch_tile",))
def discriminator_forward(state, prepared_params, *, batch_tile=512):
    """Fused 3-layer MLP forward.

    state: [B, state_dim] float32; prepared_params from prepare_params().
    Returns logits [B, num_skills] float32.
    """
    w1, b1, w2, b2, w3, b3 = prepared_params
    B, state_dim = state.shape
    hidden = w1.shape[1]
    num_skills = w3.shape[1]

    bt = _pick_batch_tile(B, batch_tile)
    grid = (pl.cdiv(B, bt),)

    flops = 2 * B * (state_dim * hidden + hidden * hidden + hidden * num_skills)
    bytes_accessed = (
        B * state_dim * 4                                   # x (f32 in)
        + B * num_skills * 4                                 # logits (f32 out)
        + (state_dim * hidden + hidden * hidden + hidden * num_skills) * 2  # bf16 weights
        + (2 * hidden + num_skills) * 4                      # f32 biases
    )

    return pl.pallas_call(
        _discriminator_kernel,
        out_shape=jax.ShapeDtypeStruct((B, num_skills), jnp.float32),
        grid_spec=pltpu.PrefetchScalarGridSpec(
            num_scalar_prefetch=0,
            grid=grid,
            in_specs=[
                pl.BlockSpec((bt, state_dim), lambda i: (i, 0)),      # x tile (pipelined)
                pl.BlockSpec((state_dim, hidden), lambda i: (0, 0)),  # w1 (VMEM-resident)
                pl.BlockSpec((1, hidden), lambda i: (0, 0)),          # b1
                pl.BlockSpec((hidden, hidden), lambda i: (0, 0)),     # w2
                pl.BlockSpec((1, hidden), lambda i: (0, 0)),          # b2
                pl.BlockSpec((hidden, num_skills), lambda i: (0, 0)), # w3 (unpadded)
                pl.BlockSpec((1, num_skills), lambda i: (0, 0)),      # b3 (unpadded)
            ],
            out_specs=pl.BlockSpec((bt, num_skills), lambda i: (i, 0)),
        ),
        compiler_params=pltpu.CompilerParams(
            dimension_semantics=("parallel",),  # batch grid splits across TCs on v7x
        ),
        cost_estimate=pl.CostEstimate(
            flops=flops, transcendentals=0, bytes_accessed=bytes_accessed
        ),
    )(state, w1, b1, w2, b2, w3, b3)


def init_params(key, state_dim, num_skills, hidden_size=256):
    """Xavier-uniform init (matches initializer='xavier uniform'); biases zero.
    Weights stored as [in_features, out_features] so the kernel computes x @ W + b,
    mathematically identical to PyTorch's x @ W.T + b with W of shape [out, in]."""

    def xavier_uniform(k, fan_in, fan_out):
        limit = jnp.sqrt(6.0 / (fan_in + fan_out))
        return jax.random.uniform(k, (fan_in, fan_out), jnp.float32, -limit, limit)

    k1, k2, k3 = jax.random.split(key, 3)
    w1 = xavier_uniform(k1, state_dim, hidden_size)
    b1 = jnp.zeros((hidden_size,), jnp.float32)
    w2 = xavier_uniform(k2, hidden_size, hidden_size)
    b2 = jnp.zeros((hidden_size,), jnp.float32)
    w3 = xavier_uniform(k3, hidden_size, num_skills)
    b3 = jnp.zeros((num_skills,), jnp.float32)
    return (w1, b1, w2, b2, w3, b3)


def prepare_params(params):
    """One-time conversion to the kernel-ready layout/dtype (hoists per-call casts out of
    the hot path): bf16 [in, out] weights, f32 (1, out) biases."""
    w1, b1, w2, b2, w3, b3 = params
    return (
        w1.astype(jnp.bfloat16), jnp.asarray(b1, jnp.float32).reshape(1, -1),
        w2.astype(jnp.bfloat16), jnp.asarray(b2, jnp.float32).reshape(1, -1),
        w3.astype(jnp.bfloat16), jnp.asarray(b3, jnp.float32).reshape(1, -1),
    )


def reference_forward_bf16(state, params):
    """Precision-matched reference: bf16 operands, f32 accumulation, f32 bias/ReLU."""
    w1, b1, w2, b2, w3, b3 = params
    x = state.astype(jnp.bfloat16)
    h1 = jnp.dot(x, w1.astype(jnp.bfloat16), preferred_element_type=jnp.float32) + b1
    h1 = jnp.maximum(h1, 0.0).astype(jnp.bfloat16)
    h2 = jnp.dot(h1, w2.astype(jnp.bfloat16), preferred_element_type=jnp.float32) + b2
    h2 = jnp.maximum(h2, 0.0).astype(jnp.bfloat16)
    return jnp.dot(h2, w3.astype(jnp.bfloat16), preferred_element_type=jnp.float32) + b3


if __name__ == "__main__":
    # Shapes consistent with the module: state [B, state_dim] -> logits [B, num_skills].
    state_dim, num_skills, hidden = 32, 8, 256

    key = jax.random.PRNGKey(0)
    k_params, k_state = jax.random.split(key)
    params = init_params(k_params, state_dim, num_skills, hidden)
    prepared = prepare_params(params)

    # Test 1: non-multiple batch with a small tile -> 3-step grid with a ragged last tile.
    B1 = 300
    state1 = jax.random.normal(k_state, (B1, state_dim), jnp.float32)
    out1 = jax.block_until_ready(discriminator_forward(state1, prepared, batch_tile=128))
    ref1 = reference_forward_bf16(state1, params)
    assert out1.shape == (B1, num_skills)
    assert jnp.allclose(out1, ref1, atol=2e-2, rtol=2e-2), float(jnp.max(jnp.abs(out1 - ref1)))

    # Test 2: default tile; batch-tile picker splits into a 2-step grid (v7x megacore path).
    B2 = 512
    state2 = jax.random.normal(jax.random.PRNGKey(1), (B2, state_dim), jnp.float32)
    out2 = jax.block_until_ready(discriminator_forward(state2, prepared))
    ref2 = reference_forward_bf16(state2, params)
    assert out2.shape == (B2, num_skills)
    assert jnp.allclose(out2, ref2, atol=2e-2, rtol=2e-2), float(jnp.max(jnp.abs(out2 - ref2)))

    print("KERNEL_OK")
</pallas_src>

<mosaic_0001>
module attributes {stable_mosaic.version = 11 : i64} {
  func.func @_discriminator_kernel(%arg0: i32, %arg1: memref<128x32xf32, #tpu.memory_space<vmem>>, %arg2: memref<32x256xbf16, #tpu.memory_space<vmem>>, %arg3: memref<1x256xf32, #tpu.memory_space<vmem>>, %arg4: memref<256x256xbf16, #tpu.memory_space<vmem>>, %arg5: memref<1x256xf32, #tpu.memory_space<vmem>>, %arg6: memref<256x8xbf16, #tpu.memory_space<vmem>>, %arg7: memref<1x8xf32, #tpu.memory_space<vmem>>, %arg8: memref<128x8xf32, #tpu.memory_space<vmem>>) attributes {dimension_semantics = [#tpu.dimension_semantics<parallel>], iteration_bounds = array<i64: 3>, scalar_prefetch = 0 : i64, scratch_operands = 0 : i64, tpu.core_type = #tpu.core_type<tc>, window_params = [{transform_indices = @transform_0, window_bounds = array<i64: 128, 32>}, {pipeline_mode = #tpu.pipeline_mode<synchronous>, transform_indices = @transform_1, window_bounds = array<i64: 32, 256>}, {pipeline_mode = #tpu.pipeline_mode<synchronous>, transform_indices = @transform_2, window_bounds = array<i64: 1, 256>}, {pipeline_mode = #tpu.pipeline_mode<synchronous>, transform_indices = @transform_3, window_bounds = array<i64: 256, 256>}, {pipeline_mode = #tpu.pipeline_mode<synchronous>, transform_indices = @transform_4, window_bounds = array<i64: 1, 256>}, {pipeline_mode = #tpu.pipeline_mode<synchronous>, transform_indices = @transform_5, window_bounds = array<i64: 256, 8>}, {pipeline_mode = #tpu.pipeline_mode<synchronous>, transform_indices = @transform_6, window_bounds = array<i64: 1, 8>}, {transform_indices = @transform_7, window_bounds = array<i64: 128, 8>}]} {
    %c0 = arith.constant 0 : index
    %c0_0 = arith.constant 0 : index
    %0 = vector.load %arg1[%c0, %c0_0] : memref<128x32xf32, #tpu.memory_space<vmem>>, vector<128x32xf32>
    %1 = arith.truncf %0 : vector<128x32xf32> to vector<128x32xbf16>
    %c0_1 = arith.constant 0 : index
    %c0_2 = arith.constant 0 : index
    %2 = vector.load %arg2[%c0_1, %c0_2] : memref<32x256xbf16, #tpu.memory_space<vmem>>, vector<32x256xbf16>
    %cst = arith.constant dense<0.000000e+00> : vector<128x256xf32>
    %3 = tpu.matmul %1, %2, %cst {dimension_numbers = #tpu.dot_dimension_numbers<[1], [0], [0], [1], [0, 0, 1, 1], [], []>} : vector<128x32xbf16>, vector<32x256xbf16>, vector<128x256xf32> -> vector<128x256xf32>
    %c0_3 = arith.constant 0 : index
    %c0_4 = arith.constant 0 : index
    %4 = vector.load %arg3[%c0_3, %c0_4] : memref<1x256xf32, #tpu.memory_space<vmem>>, vector<1x256xf32>
    %5 = vector.broadcast %4 : vector<1x256xf32> to vector<128x256xf32>
    %6 = arith.addf %3, %5 : vector<128x256xf32>
    %cst_5 = arith.constant 0.000000e+00 : f32
    %7 = vector.broadcast %cst_5 : f32 to vector<128x256xf32>
    %8 = arith.maximumf %6, %7 : vector<128x256xf32>
    %9 = arith.truncf %8 : vector<128x256xf32> to vector<128x256xbf16>
    %c0_6 = arith.constant 0 : index
    %c0_7 = arith.constant 0 : index
    %10 = vector.load %arg4[%c0_6, %c0_7] : memref<256x256xbf16, #tpu.memory_space<vmem>>, vector<256x256xbf16>
    %cst_8 = arith.constant dense<0.000000e+00> : vector<128x256xf32>
    %11 = tpu.matmul %9, %10, %cst_8 {dimension_numbers = #tpu.dot_dimension_numbers<[1], [0], [0], [1], [0, 0, 1, 1], [], []>} : vector<128x256xbf16>, vector<256x256xbf16>, vector<128x256xf32> -> vector<128x256xf32>
    %c0_9 = arith.constant 0 : index
    %c0_10 = arith.constant 0 : index
    %12 = vector.load %arg5[%c0_9, %c0_10] : memref<1x256xf32, #tpu.memory_space<vmem>>, vector<1x256xf32>
    %13 = vector.broadcast %12 : vector<1x256xf32> to vector<128x256xf32>
    %14 = arith.addf %11, %13 : vector<128x256xf32>
    %cst_11 = arith.constant 0.000000e+00 : f32
    %15 = vector.broadcast %cst_11 : f32 to vector<128x256xf32>
    %16 = arith.maximumf %14, %15 : vector<128x256xf32>
    %17 = arith.truncf %16 : vector<128x256xf32> to vector<128x256xbf16>
    %c0_12 = arith.constant 0 : index
    %c0_13 = arith.constant 0 : index
    %18 = vector.load %arg6[%c0_12, %c0_13] : memref<256x8xbf16, #tpu.memory_space<vmem>>, vector<256x8xbf16>
    %cst_14 = arith.constant dense<0.000000e+00> : vector<128x8xf32>
    %19 = tpu.matmul %17, %18, %cst_14 {dimension_numbers = #tpu.dot_dimension_numbers<[1], [0], [0], [1], [0, 0, 1, 1], [], []>} : vector<128x256xbf16>, vector<256x8xbf16>, vector<128x8xf32> -> vector<128x8xf32>
    %c0_15 = arith.constant 0 : index
    %c0_16 = arith.constant 0 : index
    %20 = vector.load %arg7[%c0_15, %c0_16] : memref<1x8xf32, #tpu.memory_space<vmem>>, vector<1x8xf32>
    %21 = vector.broadcast %20 : vector<1x8xf32> to vector<128x8xf32>
    %22 = arith.addf %19, %21 : vector<128x8xf32>
    %c0_17 = arith.constant 0 : index
    %c0_18 = arith.constant 0 : index
    %23 = vector.load %arg8[%c0_17, %c0_18] : memref<128x8xf32, #tpu.memory_space<vmem>>, vector<128x8xf32>
    tpu.vector_store %arg8[%c0_17, %c0_18], %22 {strides = array<i32>} : memref<128x8xf32, #tpu.memory_space<vmem>>, vector<128x8xf32>,
    return
  }
  func.func @transform_0(%arg0: i32) -> (i32, i32) {
    %c0_i32 = arith.constant 0 : i32
    %c0_i32_0 = arith.constant 0 : i32
    return %arg0, %c0_i32 : i32, i32
  }
  func.func @transform_1(%arg0: i32) -> (i32, i32) {
    %c0_i32 = arith.constant 0 : i32
    %c0_i32_0 = arith.constant 0 : i32
    %c0_i32_1 = arith.constant 0 : i32
    return %c0_i32, %c0_i32_0 : i32, i32
  }
  func.func @transform_2(%arg0: i32) -> (i32, i32) {
    %c0_i32 = arith.constant 0 : i32
    %c0_i32_0 = arith.constant 0 : i32
    %c0_i32_1 = arith.constant 0 : i32
    return %c0_i32, %c0_i32_0 : i32, i32
  }
  func.func @transform_3(%arg0: i32) -> (i32, i32) {
    %c0_i32 = arith.constant 0 : i32
    %c0_i32_0 = arith.constant 0 : i32
    %c0_i32_1 = arith.constant 0 : i32
    return %c0_i32, %c0_i32_0 : i32, i32
  }
  func.func @transform_4(%arg0: i32) -> (i32, i32) {
    %c0_i32 = arith.constant 0 : i32
    %c0_i32_0 = arith.constant 0 : i32
    %c0_i32_1 = arith.constant 0 : i32
    return %c0_i32, %c0_i32_0 : i32, i32
  }
  func.func @transform_5(%arg0: i32) -> (i32, i32) {
    %c0_i32 = arith.constant 0 : i32
    %c0_i32_0 = arith.constant 0 : i32
    %c0_i32_1 = arith.constant 0 : i32
    return %c0_i32, %c0_i32_0 : i32, i32
  }
  func.func @transform_6(%arg0: i32) -> (i32, i32) {
    %c0_i32 = arith.constant 0 : i32
    %c0_i32_0 = arith.constant 0 : i32
    %c0_i32_1 = arith.constant 0 : i32
    return %c0_i32, %c0_i32_0 : i32, i32
  }
  func.func @transform_7(%arg0: i32) -> (i32, i32) {
    %c0_i32 = arith.constant 0 : i32
    %c0_i32_0 = arith.constant 0 : i32
    return %arg0, %c0_i32 : i32, i32
  }
}

</mosaic_0001>

<llo_original>
// kernel: discriminator_forward.1
$region0: #{discriminator_forward.1}
  #allocation0 [shape = 'u32[]', space=smem, size = 0x4, offset = 0x4, fixed_abs, tag = 'smem constant byte address 0x4 - core index']
  #allocation1 [shape = 'u32[144,128]{1,0:T(1,128)}', space=vmem, size = 0x12000, scoped, tag = 'internal scratch']
  %s0 = inlined_call_operand.vmem [shape: f32[300,32], index: 0, kind: input, shape index: {}]
  %s1 = inlined_call_operand.vmem [shape: bf16[32,256], index: 1, kind: input, shape index: {}]
  %s2 = inlined_call_operand.vmem [shape: f32[1,256], index: 2, kind: input, shape index: {}]
  %s3 = inlined_call_operand.vmem [shape: bf16[256,256], index: 3, kind: input, shape index: {}]
  %s4 = inlined_call_operand.vmem [shape: f32[1,256], index: 4, kind: input, shape index: {}]
  %s5 = inlined_call_operand.vmem [shape: bf16[256,8], index: 5, kind: input, shape index: {}]
  %s6 = inlined_call_operand.vmem [shape: f32[1,8], index: 6, kind: input, shape index: {}]
  %s7 = inlined_call_operand.vmem [shape: f32[300,8], index: 7, kind: output, shape index: {}]
  %s8 = sld [smem:[#allocation0]]
  $region109: #{discriminator_forward.1} parent=0
    _
  %s10 = ssub.s32 1, %s8
  %s11 = scalar_select 0, %s10, %s8
  $region1: #{discriminator_forward.1} parent=0
    #allocation2 [shape = 'u8[131072]{0}', space=vmem, size = 0x20000, scoped, tag = 'output window, operand 0']
    loop: start=0, step=1, limit=5
    $region2: #{discriminator_forward.1} parent=1 // loop_pre_header
      _
    $region3: #{discriminator_forward.1} parent=1 // loop_header
      %s13 = sphi 0, %s17
      %p14 = scmp.ge.s32.totalorder %s13, 5
      %s23 = sphi 0, %s25
      %s26 = sphi 0, %s23
      %s27 = sphi 0, %s26
      %s43 = sphi 0, %s27
      %s47 = sphi 0, %s47
      %s49 = sphi 0, %s47
      %s50 = sphi 0, %s49
      %s64 = sphi 0, %s50
      %s68 = sphi 0, %s68
      %s70 = sphi 0, %s68
      %s71 = sphi 0, %s70
      %s85 = sphi 0, %s71
      %s89 = sphi 0, %s89
      %s91 = sphi 0, %s89
      %s92 = sphi 0, %s91
      %s106 = sphi 0, %s92
      %s110 = sphi 0, %s110
      %s112 = sphi 0, %s110
      %s113 = sphi 0, %s112
      %s127 = sphi 0, %s113
      %s131 = sphi 0, %s131
      %s133 = sphi 0, %s131
      %s134 = sphi 0, %s133
      %s148 = sphi 0, %s134
      %s152 = sphi 0, %s152
      %s154 = sphi 0, %s152
      %s155 = sphi 0, %s154
      %s169 = sphi 0, %s155
      %s175 = sphi 0, %s177
      %s178 = sphi 0, %s175
      %s179 = sphi 0, %s178
      %s195 = sphi 0, %s179
    $region4: #{discriminator_forward.1} parent=1 // loop_header_branch
      %16 = sbr.rel (%p14) target = $region8
    $region5: #{discriminator_forward.1} parent=1 // loop_body
      %s18 = ssub.s32 %s13, 1
      %s19 = ssub.s32 %s13, 2
      %s20 = sadd.s32 %s13, 1
      %s21 = ssub.s32 %s13, %s20
      %p22 = scmp.eq.s32.totalorder %s21, 0
      %s24 = sadd.s32 %s23, 1
      %s25 = scalar_select %p22, %s23, %s24
      %p28 = pneg %p22
      %p29 = scmp.eq.s32.totalorder %s13, 2
      %p30 = por %p28, %p29
      %p31 = scmp.ne.s32.totalorder %s23, %s26
      %p32 = scmp.eq.s32.totalorder %s13, 0
      %p33 = por %p31, %p32
      %p34 = scmp.ne.s32.totalorder %s23, %s26
      %p35 = scmp.eq.s32.totalorder %s18, 2
      %p36 = por %p34, %p35
      %p37 = scmp.ne.s32.totalorder %s26, %s27
      %p38 = scmp.eq.s32.totalorder %s18, 0
      %p39 = por %p37, %p38
      %p40 = scmp.ne.s32.totalorder %s26, %s27
      %p41 = scmp.eq.s32.totalorder %s19, 2
      %p42 = por %p40, %p41
      %p44 = scmp.ne.s32.totalorder %s27, %s43
      %p45 = scmp.eq.s32.totalorder %s19, 0
      %p46 = por %p44, %p45
      %s48 = sadd.s32 %s47, 1
      %p51 = scmp.eq.s32.totalorder %s13, 2
      %p52 = scmp.ne.s32.totalorder %s47, %s49
      %p53 = scmp.eq.s32.totalorder %s13, 0
      %p54 = por %p52, %p53
      %p55 = scmp.ne.s32.totalorder %s47, %s49
      %p56 = scmp.eq.s32.totalorder %s18, 2
      %p57 = por %p55, %p56
      %p58 = scmp.ne.s32.totalorder %s49, %s50
      %p59 = scmp.eq.s32.totalorder %s18, 0
      %p60 = por %p58, %p59
      %p61 = scmp.ne.s32.totalorder %s49, %s50
      %p62 = scmp.eq.s32.totalorder %s19, 2
      %p63 = por %p61, %p62
      %p65 = scmp.ne.s32.totalorder %s50, %s64
      %p66 = scmp.eq.s32.totalorder %s19, 0
      %p67 = por %p65, %p66
      %s69 = sadd.s32 %s68, 1
      %p72 = scmp.eq.s32.totalorder %s13, 2
      %p73 = scmp.ne.s32.totalorder %s68, %s70
      %p74 = scmp.eq.s32.totalorder %s13, 0
      %p75 = por %p73, %p74
      %p76 = scmp.ne.s32.totalorder %s68, %s70
      %p77 = scmp.eq.s32.totalorder %s18, 2
      %p78 = por %p76, %p77
      %p79 = scmp.ne.s32.totalorder %s70, %s71
      %p80 = scmp.eq.s32.totalorder %s18, 0
      %p81 = por %p79, %p80
      %p82 = scmp.ne.s32.totalorder %s70, %s71
      %p83 = scmp.eq.s32.totalorder %s19, 2
      %p84 = por %p82, %p83
      %p86 = scmp.ne.s32.totalorder %s71, %s85
      %p87 = scmp.eq.s32.totalorder %s19, 0
      %p88 = por %p86, %p87
      %s90 = sadd.s32 %s89, 1
      %p93 = scmp.eq.s32.totalorder %s13, 2
      %p94 = scmp.ne.s32.totalorder %s89, %s91
      %p95 = scmp.eq.s32.totalorder %s13, 0
      %p96 = por %p94, %p95
      %p97 = scmp.ne.s32.totalorder %s89, %s91
      %p98 = scmp.eq.s32.totalorder %s18, 2
      %p99 = por %p97, %p98
      %p100 = scmp.ne.s32.totalorder %s91, %s92
      %p101 = scmp.eq.s32.totalorder %s18, 0
      %p102 = por %p100, %p101
      %p103 = scmp.ne.s32.totalorder %s91, %s92
      %p104 = scmp.eq.s32.totalorder %s19, 2
      %p105 = por %p103, %p104
      %p107 = scmp.ne.s32.totalorder %s92, %s106
      %p108 = scmp.eq.s32.totalorder %s19, 0
      %p109 = por %p107, %p108
      %s111 = sadd.s32 %s110, 1
      %p114 = scmp.eq.s32.totalorder %s13, 2
      %p115 = scmp.ne.s32.totalorder %s110, %s112
      %p116 = scmp.eq.s32.totalorder %s13, 0
      %p117 = por %p115, %p116
      %p118 = scmp.ne.s32.totalorder %s110, %s112
      %p119 = scmp.eq.s32.totalorder %s18, 2
      %p120 = por %p118, %p119
      %p121 = scmp.ne.s32.totalorder %s112, %s113
      %p122 = scmp.eq.s32.totalorder %s18, 0
      %p123 = por %p121, %p122
      %p124 = scmp.ne.s32.totalorder %s112, %s113
      %p125 = scmp.eq.s32.totalorder %s19, 2
      %p126 = por %p124, %p125
      %p128 = scmp.ne.s32.totalorder %s113, %s127
      %p129 = scmp.eq.s32.totalorder %s19, 0
      %p130 = por %p128, %p129
      %s132 = sadd.s32 %s131, 1
      %p135 = scmp.eq.s32.totalorder %s13, 2
      %p136 = scmp.ne.s32.totalorder %s131, %s133
      %p137 = scmp.eq.s32.totalorder %s13, 0
      %p138 = por %p136, %p137
      %p139 = scmp.ne.s32.totalorder %s131, %s133
      %p140 = scmp.eq.s32.totalorder %s18, 2
      %p141 = por %p139, %p140
      %p142 = scmp.ne.s32.totalorder %s133, %s134
      %p143 = scmp.eq.s32.totalorder %s18, 0
      %p144 = por %p142, %p143
      %p145 = scmp.ne.s32.totalorder %s133, %s134
      %p146 = scmp.eq.s32.totalorder %s19, 2
      %p147 = por %p145, %p146
      %p149 = scmp.ne.s32.totalorder %s134, %s148
      %p150 = scmp.eq.s32.totalorder %s19, 0
      %p151 = por %p149, %p150
      %s153 = sadd.s32 %s152, 1
      %p156 = scmp.eq.s32.totalorder %s13, 2
      %p157 = scmp.ne.s32.totalorder %s152, %s154
      %p158 = scmp.eq.s32.totalorder %s13, 0
      %p159 = por %p157, %p158
      %p160 = scmp.ne.s32.totalorder %s152, %s154
      %p161 = scmp.eq.s32.totalorder %s18, 2
      %p162 = por %p160, %p161
      %p163 = scmp.ne.s32.totalorder %s154, %s155
      %p164 = scmp.eq.s32.totalorder %s18, 0
      %p165 = por %p163, %p164
      %p166 = scmp.ne.s32.totalorder %s154, %s155
      %p167 = scmp.eq.s32.totalorder %s19, 2
      %p168 = por %p166, %p167
      %p170 = scmp.ne.s32.totalorder %s155, %s169
      %p171 = scmp.eq.s32.totalorder %s19, 0
      %p172 = por %p170, %p171
      %s173 = ssub.s32 %s13, %s20
      %p174 = scmp.eq.s32.totalorder %s173, 0
      %s176 = sadd.s32 %s175, 1
      %s177 = scalar_select %p174, %s175, %s176
      %p180 = pneg %p174
      %p181 = scmp.eq.s32.totalorder %s13, 2
      %p182 = por %p180, %p181
      %p183 = scmp.ne.s32.totalorder %s175, %s178
      %p184 = scmp.eq.s32.totalorder %s13, 0
      %p185 = por %p183, %p184
      %p186 = scmp.ne.s32.totalorder %s175, %s178
      %p187 = scmp.eq.s32.totalorder %s18, 2
      %p188 = por %p186, %p187
      %p189 = scmp.ne.s32.totalorder %s178, %s179
      %p190 = scmp.eq.s32.totalorder %s18, 0
      %p191 = por %p189, %p190
      %p192 = scmp.ne.s32.totalorder %s178, %s179
      %p193 = scmp.eq.s32.totalorder %s19, 2
      %p194 = por %p192, %p193
      %p196 = scmp.ne.s32.totalorder %s179, %s195
      %p197 = scmp.eq.s32.totalorder %s19, 0
      %p198 = por %p196, %p197
      %p199 = scmp.le.s32.totalorder 1, %s13
      %p200 = scmp.lt.s32.totalorder %s13, 4
      %p201 = pnand %p199, %p200
      %p202 = pneg %p201
      // Predicated region
      $region9: #{discriminator_forward.1} parent=5 // pred_check
        _
      $region10: #{discriminator_forward.1} parent=5 // pred_check_branch
        %204 = sbr.rel (%p201) target = $region12
      $region11: #{discriminator_forward.1} parent=5 // pred_region
        %s205 = ssub.s32 %s13, 1
        // Predicated region
        $region13: #{discriminator_forward.1} parent=11 // pred_check
          %p206 = pneg %p60
        $region14: #{discriminator_forward.1} parent=11 // pred_check_branch
          %208 = sbr.rel (%p206) target = $region16
        $region15: #{discriminator_forward.1} parent=11 // pred_region
          _
        $region16: #{discriminator_forward.1} parent=11 // pred_fallthru
          _
        // Predicated region
        $region17: #{discriminator_forward.1} parent=11 // pred_check
          %p209 = pneg %p81
        $region18: #{discriminator_forward.1} parent=11 // pred_check_branch
          %211 = sbr.rel (%p209) target = $region20
        $region19: #{discriminator_forward.1} parent=11 // pred_region
          _
        $region20: #{discriminator_forward.1} parent=11 // pred_fallthru
          _
        // Predicated region
        $region21: #{discriminator_forward.1} parent=11 // pred_check
          %p212 = pneg %p102
        $region22: #{discriminator_forward.1} parent=11 // pred_check_branch
          %214 = sbr.rel (%p212) target = $region24
        $region23: #{discriminator_forward.1} parent=11 // pred_region
          _
        $region24: #{discriminator_forward.1} parent=11 // pred_fallthru
          _
        // Predicated region
        $region25: #{discriminator_forward.1} parent=11 // pred_check
          %p215 = pneg %p123
        $region26: #{discriminator_forward.1} parent=11 // pred_check_branch
          %217 = sbr.rel (%p215) target = $region28
        $region27: #{discriminator_forward.1} parent=11 // pred_region
          _
        $region28: #{discriminator_forward.1} parent=11 // pred_fallthru
          _
        // Predicated region
        $region29: #{discriminator_forward.1} parent=11 // pred_check
          %p218 = pneg %p144
        $region30: #{discriminator_forward.1} parent=11 // pred_check_branch
          %220 = sbr.rel (%p218) target = $region32
        $region31: #{discriminator_forward.1} parent=11 // pred_region
          _
        $region32: #{discriminator_forward.1} parent=11 // pred_fallthru
          _
        // Predicated region
        $region33: #{discriminator_forward.1} parent=11 // pred_check
          %p221 = pneg %p165
        $region34: #{discriminator_forward.1} parent=11 // pred_check_branch
          %223 = sbr.rel (%p221) target = $region36
        $region35: #{discriminator_forward.1} parent=11 // pred_region
          _
        $region36: #{discriminator_forward.1} parent=11 // pred_fallthru
          _
      $region12: #{discriminator_forward.1} parent=5 // pred_fallthru
        _
      %p224 = scmp.lt.s32.totalorder %s13, 3
      // Predicated region
      $region37: #{discriminator_forward.1} parent=5 // pred_check
        %p225 = pneg %p224
      $region38: #{discriminator_forward.1} parent=5 // pred_check_branch
        %227 = sbr.rel (%p225) target = $region40
      $region39: #{discriminator_forward.1} parent=5 // pred_region
        // Predicated region
        $region41: #{discriminator_forward.1} parent=39 // pred_check
          %p228 = pneg %p33
        $region42: #{discriminator_forward.1} parent=39 // pred_check_branch
          %230 = sbr.rel (%p228) target = $region44
        $region43: #{discriminator_forward.1} parent=39 // pred_region
          %s231 = smul.u32 16, %s13
          %s232 = ssub.s32 38, %s231
          %p233 = scmp.lt.s32.totalorder %s232, 16
          %s234 = scalar_select %p233, %s232, 16
          %s235 = smul.u32 128, %s234
          %p236 = scmp.lt.s32.totalorder %s231, 37
          %s237 = scalar_select %p236, %s231, 37
          %s238 = smul.addr %s237, 8
          %s239 = scalar_lea.vmem %s0, %s238
          %s240 = smul.u32 16, %s13
          %s241 = ssub.s32 38, %s240
          %p242 = scmp.lt.s32.totalorder %s241, 16
          %s243 = scalar_select %p242, %s241, 16
          %s244 = smul.u32 128, %s243
        $region44: #{discriminator_forward.1} parent=39 // pred_fallthru
          _
      $region40: #{discriminator_forward.1} parent=5 // pred_fallthru
        _
      %p245 = scmp.le.s32.totalorder 1, %s13
      %p246 = scmp.lt.s32.totalorder %s13, 4
      %p247 = pnand %p245, %p246
      %p248 = pneg %p247
      // Predicated region
      $region45: #{discriminator_forward.1} parent=5 // pred_check
        _
      $region46: #{discriminator_forward.1} parent=5 // pred_check_branch
        %250 = sbr.rel (%p247) target = $region48
      $region47: #{discriminator_forward.1} parent=5 // pred_region
        %s251 = ssub.s32 %s13, 1
        %s252 = smul.u32 16, %s18
        %s253 = ssub.s32 38, %s252
        %p254 = scmp.lt.s32.totalorder %s253, 16
        %s255 = scalar_select %p254, %s253, 16
        %s256 = smul.u32 128, %s255
        %p257 = scmp.lt.s32.totalorder %s252, 37
        %s258 = scalar_select %p257, %s252, 37
        %s259 = smul.addr %s258, 8
        %s260 = scalar_lea.vmem %s0, %s259
        %p261 = pneg %p39
        %p262 = pneg %p36
        %p263 = pneg %p60
        %p264 = pneg %p57
        %p265 = pneg %p81
        %p266 = pneg %p78
        %p267 = pneg %p102
        %p268 = pneg %p99
        %p269 = pneg %p123
        %p270 = pneg %p120
        %p271 = pneg %p144
        %p272 = pneg %p141
        %p273 = pneg %p165
        %p274 = pneg %p162
        %p275 = pneg %p191
        %p276 = pneg %p188
        %s277 = sand.u32 %s178, 1
        %s278 = sand.u32 %s178, 1
        %s279 = smul.addr %s278, 128
        %s280 = scalar_lea.vmem [#allocation2], %s279
        %s281 = smul.u32 16, %s18
        %s282 = ssub.s32 38, %s281
        %p283 = scmp.lt.s32.totalorder %s282, 16
        %s284 = scalar_select %p283, %s282, 16
        %s285 = smul.u32 128, %s284
        %p286 = scmp.lt.s32.totalorder %s281, 37
        %s287 = scalar_select %p286, %s281, 37
        %s288 = smul.addr %s287, 8
        %s289 = scalar_lea.vmem %s0, %s288
        %s290 = smul.u32 16, %s18
        %s291 = ssub.s32 38, %s290
        %p292 = scmp.lt.s32.totalorder %s291, 16
        %s293 = scalar_select %p292, %s291, 16
        %s294 = smul.u32 128, %s293
        %s295 = smul.u32 16, %s18
        %s296 = ssub.s32 38, %s295
        %p297 = scmp.lt.s32.totalorder %s296, 16
        %s298 = scalar_select %p297, %s296, 16
        %s299 = smul.u32 128, %s298
        %v301 = vld [vmem:[%s289] sm:$0xff]
        %v302 = vld [vmem:[%s289 + $0x8] sm:$0xff]
        %v303 = vld [vmem:[%s289 + $0x10] sm:$0xff]
        %v304 = vld [vmem:[%s289 + $0x18] sm:$0xff]
        %v305 = vld [vmem:[%s289 + $0x20] sm:$0xff]
        %v306 = vld [vmem:[%s289 + $0x28] sm:$0xff]
        %v307 = vld [vmem:[%s289 + $0x30] sm:$0xff]
        %v308 = vld [vmem:[%s289 + $0x38] sm:$0xff]
        %v309 = vld [vmem:[%s289 + $0x40] sm:$0xff]
        %v310 = vld [vmem:[%s289 + $0x48] sm:$0xff]
        %v311 = vld [vmem:[%s289 + $0x50] sm:$0xff]
        %v312 = vld [vmem:[%s289 + $0x58] sm:$0xff]
        %v313 = vld [vmem:[%s289 + $0x60] sm:$0xff]
        %v314 = vld [vmem:[%s289 + $0x68] sm:$0xff]
        %v315 = vld [vmem:[%s289 + $0x70] sm:$0xff]
        %v316 = vld [vmem:[%s289 + $0x78] sm:$0xff]
        %v317 = vpack.c.bf16 %v302, %v301
        %v318 = vpack.c.bf16 %v304, %v303
        %v319 = vpack.c.bf16 %v306, %v305
        %v320 = vpack.c.bf16 %v308, %v307
        %v321 = vpack.c.bf16 %v310, %v309
        %v322 = vpack.c.bf16 %v312, %v311
        %v323 = vpack.c.bf16 %v314, %v313
        %v324 = vpack.c.bf16 %v316, %v315
        %v325 = vld [vmem:[%s1] sm:$0xff]
        %v326 = vld [vmem:[%s1 + $0x8] sm:$0xff]
        %v327 = vld [vmem:[%s1 + $0x10] sm:$0xff]
        %v328 = vld [vmem:[%s1 + $0x18] sm:$0xff]
        %v329 = vld [vmem:[%s2] sm:$0x3]
        %v331 = vlaneseq
        %v332 = vshrl.u32 %v331, 7
        %v333 = vsub.s32 0, %v332
        %v334 = vrot.slane %v329, %v333
        %v335 = vlaneseq
        %v336 = vshrl.u32 %v335, 7
        %v337 = vsub.s32 1, %v336
        %v338 = vrot.slane %v329, %v337
        %v345 = vunpack.c.l.b16 %v325
        %v346 = vunpack.c.h.b16 %v325
        %v347 = vunpack.c.l.b16 %v326
        %v348 = vunpack.c.h.b16 %v326
        %v349 = vunpack.c.l.b16 %v327
        %v350 = vunpack.c.h.b16 %v327
        %v351 = vunpack.c.l.b16 %v328
        %v352 = vunpack.c.h.b16 %v328
        %v353 = vpack.c.b16 %v347, %v345
        %v354 = vpack.c.b16 %v348, %v346
        %v355 = vpack.c.b16 %v351, %v349
        %v356 = vpack.c.b16 %v352, %v350
        %vm361 = vcmask 261120
        %v363 = vsel %vm361, %v317, 0
        %v366 = vsel %vm361, %v318, 0
        %v369 = vsel %vm361, %v319, 0
        %v372 = vsel %vm361, %v320, 0
        %v375 = vsel %vm361, %v321, 0
        %v378 = vsel %vm361, %v322, 0
        %v381 = vsel %vm361, %v323, 0
        %v384 = vsel %vm361, %v324, 0
        %386 = vmatprep.subr.bf16.mxu0 %v354
        %387 = vmatpush1.bf16.msra.mxu0 %v353
        %388 = vmatprep.subr.bf16.mxu0 %v356
        %389 = vmatpush1.bf16.msra.mxu0 %v355
        %390 = vmatprep.subr.bf16.mxu0 0
        %391 = vmatpush1.bf16.msra.mxu0 0
        %392 = vmatprep.subr.bf16.mxu0 0
        %393 = vmatpush1.bf16.msra.mxu0 0
        %394 = vmatprep.subr.bf16.mxu0 0
        %395 = vmatpush1.bf16.msra.mxu0 0
        %396 = vmatprep.subr.bf16.mxu0 0
        %397 = vmatpush1.bf16.msra.mxu0 0
        %398 = vmatprep.subr.bf16.mxu0 0
        %399 = vmatpush1.bf16.msra.mxu0 0
        %400 = vmatprep.subr.bf16.mxu0 0
        %401 = vmatpush1.bf16.msra.mxu0 0
        %402 = vmatprep.subr.bf16.mxu0 0
        %403 = vmatpush1.bf16.msra.mxu0 0
        %404 = vmatprep.subr.bf16.mxu0 0
        %405 = vmatpush1.bf16.msra.mxu0 0
        %406 = vmatprep.subr.bf16.mxu0 0
        %407 = vmatpush1.bf16.msra.mxu0 0
        %408 = vmatprep.subr.bf16.mxu0 0
        %409 = vmatpush1.bf16.msra.mxu0 0
        %410 = vmatprep.subr.bf16.mxu0 0
        %411 = vmatpush1.bf16.msra.mxu0 0
        %412 = vmatprep.subr.bf16.mxu0 0
        %413 = vmatpush1.bf16.msra.mxu0 0
        %414 = vmatprep.subr.bf16.mxu0 0
        %415 = vmatpush1.bf16.msra.mxu0 0
        %416 = vmatprep.subr.bf16.mxu0 0
        %417 = vmatpush1.bf16.msra.mxu0 0
        %418 = vmatprep.mubr.bf16.mxu0 0
        %419 = vmatmul.mubr.bf16.gmra.mrb[0].mxu0 %v363
        %v420 = vpop.f32.mrb[0].mxu0
        %v421 = vadd.f32 %v334, %v420
        %v422 = vpop.f32.mrb[0].mxu0
        %v423 = vadd.f32 %v338, %v422
        %v424 = vpop.f32.mrb[0].mxu0
        %v425 = vadd.f32 %v334, %v424
        %v426 = vpop.f32.mrb[0].mxu0
        %v427 = vadd.f32 %v338, %v426
        %428 = vmatprep.mubr.bf16.mxu0 0
        %429 = vmatmul.mubr.bf16.gmra.mrb[0].mxu0 %v366
        %v430 = vpop.f32.mrb[0].mxu0
        %v431 = vadd.f32 %v334, %v430
        %v432 = vpop.f32.mrb[0].mxu0
        %v433 = vadd.f32 %v338, %v432
        %v434 = vpop.f32.mrb[0].mxu0
        %v435 = vadd.f32 %v334, %v434
        %v436 = vpop.f32.mrb[0].mxu0
        %v437 = vadd.f32 %v338, %v436
        %438 = vmatprep.mubr.bf16.mxu0 0
        %439 = vmatmul.mubr.bf16.gmra.mrb[0].mxu0 %v369
        %v440 = vpop.f32.mrb[0].mxu0
        %v441 = vadd.f32 %v334, %v440
        %v442 = vpop.f32.mrb[0].mxu0
        %v443 = vadd.f32 %v338, %v442
        %v444 = vpop.f32.mrb[0].mxu0
        %v445 = vadd.f32 %v334, %v444
        %v446 = vpop.f32.mrb[0].mxu0
        %v447 = vadd.f32 %v338, %v446
        %448 = vmatprep.mubr.bf16.mxu0 0
        %449 = vmatmul.mubr.bf16.gmra.mrb[0].mxu0 %v372
        %v450 = vpop.f32.mrb[0].mxu0
        %v451 = vadd.f32 %v334, %v450
        %v452 = vpop.f32.mrb[0].mxu0
        %v453 = vadd.f32 %v338, %v452
        %v454 = vpop.f32.mrb[0].mxu0
        %v455 = vadd.f32 %v334, %v454
        %v456 = vpop.f32.mrb[0].mxu0
        %v457 = vadd.f32 %v338, %v456
        %458 = vmatprep.mubr.bf16.mxu0 0
        %459 = vmatmul.mubr.bf16.gmra.mrb[0].mxu0 %v375
        %v460 = vpop.f32.mrb[0].mxu0
        %v461 = vadd.f32 %v334, %v460
        %v462 = vpop.f32.mrb[0].mxu0
        %v463 = vadd.f32 %v338, %v462
        %v464 = vpop.f32.mrb[0].mxu0
        %v465 = vadd.f32 %v334, %v464
        %v466 = vpop.f32.mrb[0].mxu0
        %v467 = vadd.f32 %v338, %v466
        %468 = vmatprep.mubr.bf16.mxu0 0
        %469 = vmatmul.mubr.bf16.gmra.mrb[0].mxu0 %v378
        %v470 = vpop.f32.mrb[0].mxu0
        %v471 = vadd.f32 %v334, %v470
        %v472 = vpop.f32.mrb[0].mxu0
        %v473 = vadd.f32 %v338, %v472
        %v474 = vpop.f32.mrb[0].mxu0
        %v475 = vadd.f32 %v334, %v474
        %v476 = vpop.f32.mrb[0].mxu0
        %v477 = vadd.f32 %v338, %v476
        %478 = vmatprep.mubr.bf16.mxu0 0
        %479 = vmatmul.mubr.bf16.gmra.mrb[0].mxu0 %v381
        %v480 = vpop.f32.mrb[0].mxu0
        %v481 = vadd.f32 %v334, %v480
        %v482 = vpop.f32.mrb[0].mxu0
        %v483 = vadd.f32 %v338, %v482
        %v484 = vpop.f32.mrb[0].mxu0
        %v485 = vadd.f32 %v334, %v484
        %v486 = vpop.f32.mrb[0].mxu0
        %v487 = vadd.f32 %v338, %v486
        %488 = vmatprep.mubr.bf16.mxu0 0
        %489 = vmatmul.mubr.bf16.gmra.mrb[0].mxu0 %v384
        %v490 = vpop.f32.mrb[0].mxu0
        %v491 = vadd.f32 %v334, %v490
        %v492 = vpop.f32.mrb[0].mxu0
        %v493 = vadd.f32 %v338, %v492
        %v494 = vpop.f32.mrb[0].mxu0
        %v495 = vadd.f32 %v334, %v494
        %v496 = vpop.f32.mrb[0].mxu0
        %v497 = vadd.f32 %v338, %v496
        %498 = vdwg.mxu0
        %v499 = vmax.f32 %v421, 0.0
        %v500 = vmax.f32 %v423, 0.0
        %v501 = vmax.f32 %v425, 0.0
        %v502 = vmax.f32 %v427, 0.0
        %v503 = vmax.f32 %v431, 0.0
        %v504 = vmax.f32 %v433, 0.0
        %v505 = vmax.f32 %v435, 0.0
        %v506 = vmax.f32 %v437, 0.0
        %v507 = vmax.f32 %v441, 0.0
        %v508 = vmax.f32 %v443, 0.0
        %v509 = vmax.f32 %v445, 0.0
        %v510 = vmax.f32 %v447, 0.0
        %v511 = vmax.f32 %v451, 0.0
        %v512 = vmax.f32 %v453, 0.0
        %v513 = vmax.f32 %v455, 0.0
        %v514 = vmax.f32 %v457, 0.0
        %v515 = vmax.f32 %v461, 0.0
        %v516 = vmax.f32 %v463, 0.0
        %v517 = vmax.f32 %v465, 0.0
        %v518 = vmax.f32 %v467, 0.0
        %v519 = vmax.f32 %v471, 0.0
        %v520 = vmax.f32 %v473, 0.0
        %v521 = vmax.f32 %v475, 0.0
        %v522 = vmax.f32 %v477, 0.0
        %v523 = vmax.f32 %v481, 0.0
        %v524 = vmax.f32 %v483, 0.0
        %v525 = vmax.f32 %v485, 0.0
        %v526 = vmax.f32 %v487, 0.0
        %v527 = vmax.f32 %v491, 0.0
        %v528 = vmax.f32 %v493, 0.0
        %v529 = vmax.f32 %v495, 0.0
        %v530 = vmax.f32 %v497, 0.0
        %v531 = vpack.c.bf16 %v501, %v499
        %v532 = vpack.c.bf16 %v502, %v500
        %v533 = vpack.c.bf16 %v505, %v503
        %v534 = vpack.c.bf16 %v506, %v504
        %v535 = vpack.c.bf16 %v509, %v507
        %v536 = vpack.c.bf16 %v510, %v508
        %v537 = vpack.c.bf16 %v513, %v511
        %v538 = vpack.c.bf16 %v514, %v512
        %v539 = vpack.c.bf16 %v517, %v515
        %v540 = vpack.c.bf16 %v518, %v516
        %v541 = vpack.c.bf16 %v521, %v519
        %v542 = vpack.c.bf16 %v522, %v520
        %v543 = vpack.c.bf16 %v525, %v523
        %v544 = vpack.c.bf16 %v526, %v524
        %v545 = vpack.c.bf16 %v529, %v527
        %v546 = vpack.c.bf16 %v530, %v528
        %v547 = vld [vmem:[%s3] sm:$0xff]
        %v548 = vld [vmem:[%s3 + $0x8] sm:$0xff]
        %v549 = vld [vmem:[%s3 + $0x10] sm:$0xff]
        %v550 = vld [vmem:[%s3 + $0x18] sm:$0xff]
        %v551 = vld [vmem:[%s3 + $0x20] sm:$0xff]
        %v552 = vld [vmem:[%s3 + $0x28] sm:$0xff]
        %v553 = vld [vmem:[%s3 + $0x30] sm:$0xff]
        %v554 = vld [vmem:[%s3 + $0x38] sm:$0xff]
        %v555 = vld [vmem:[%s3 + $0x40] sm:$0xff]
        %v556 = vld [vmem:[%s3 + $0x48] sm:$0xff]
        %v557 = vld [vmem:[%s3 + $0x50] sm:$0xff]
        %v558 = vld [vmem:[%s3 + $0x58] sm:$0xff]
        %v559 = vld [vmem:[%s3 + $0x60] sm:$0xff]
        %v560 = vld [vmem:[%s3 + $0x68] sm:$0xff]
        %v561 = vld [vmem:[%s3 + $0x70] sm:$0xff]
        %v562 = vld [vmem:[%s3 + $0x78] sm:$0xff]
        %v563 = vld [vmem:[%s3 + $0x80] sm:$0xff]
        %v564 = vld [vmem:[%s3 + $0x88] sm:$0xff]
        %v565 = vld [vmem:[%s3 + $0x90] sm:$0xff]
        %v566 = vld [vmem:[%s3 + $0x98] sm:$0xff]
        %v567 = vld [vmem:[%s3 + $0xa0] sm:$0xff]
        %v568 = vld [vmem:[%s3 + $0xa8] sm:$0xff]
        %v569 = vld [vmem:[%s3 + $0xb0] sm:$0xff]
        %v570 = vld [vmem:[%s3 + $0xb8] sm:$0xff]
        %v571 = vld [vmem:[%s3 + $0xc0] sm:$0xff]
        %v572 = vld [vmem:[%s3 + $0xc8] sm:$0xff]
        %v573 = vld [vmem:[%s3 + $0xd0] sm:$0xff]
        %v574 = vld [vmem:[%s3 + $0xd8] sm:$0xff]
        %v575 = vld [vmem:[%s3 + $0xe0] sm:$0xff]
        %v576 = vld [vmem:[%s3 + $0xe8] sm:$0xff]
        %v577 = vld [vmem:[%s3 + $0xf0] sm:$0xff]
        %v578 = vld [vmem:[%s3 + $0xf8] sm:$0xff]
        %v579 = vld [vmem:[%s4] sm:$0x3]
        %v581 = vlaneseq
        %v582 = vshrl.u32 %v581, 7
        %v583 = vsub.s32 0, %v582
        %v584 = vrot.slane %v579, %v583
        %v585 = vlaneseq
        %v586 = vshrl.u32 %v585, 7
        %v587 = vsub.s32 1, %v586
        %v588 = vrot.slane %v579, %v587
        %v623 = vunpack.c.l.b16 %v547
        %v624 = vunpack.c.h.b16 %v547
        %v625 = vunpack.c.l.b16 %v548
        %v626 = vunpack.c.h.b16 %v548
        %v627 = vunpack.c.l.b16 %v549
        %v628 = vunpack.c.h.b16 %v549
        %v629 = vunpack.c.l.b16 %v550
        %v630 = vunpack.c.h.b16 %v550
        %v631 = vunpack.c.l.b16 %v551
        %v632 = vunpack.c.h.b16 %v551
        %v633 = vunpack.c.l.b16 %v552
        %v634 = vunpack.c.h.b16 %v552
        %v635 = vunpack.c.l.b16 %v553
        %v636 = vunpack.c.h.b16 %v553
        %v637 = vunpack.c.l.b16 %v554
        %v638 = vunpack.c.h.b16 %v554
        %v639 = vunpack.c.l.b16 %v555
        %v640 = vunpack.c.h.b16 %v555
        %v641 = vunpack.c.l.b16 %v556
        %v642 = vunpack.c.h.b16 %v556
        %v643 = vunpack.c.l.b16 %v557
        %v644 = vunpack.c.h.b16 %v557
        %v645 = vunpack.c.l.b16 %v558
        %v646 = vunpack.c.h.b16 %v558
        %v647 = vunpack.c.l.b16 %v559
        %v648 = vunpack.c.h.b16 %v559
        %v649 = vunpack.c.l.b16 %v560
        %v650 = vunpack.c.h.b16 %v560
        %v651 = vunpack.c.l.b16 %v561
        %v652 = vunpack.c.h.b16 %v561
        %v653 = vunpack.c.l.b16 %v562
        %v654 = vunpack.c.h.b16 %v562
        %v655 = vunpack.c.l.b16 %v563
        %v656 = vunpack.c.h.b16 %v563
        %v657 = vunpack.c.l.b16 %v564
        %v658 = vunpack.c.h.b16 %v564
        %v659 = vunpack.c.l.b16 %v565
        %v660 = vunpack.c.h.b16 %v565
        %v661 = vunpack.c.l.b16 %v566
        %v662 = vunpack.c.h.b16 %v566
        %v663 = vunpack.c.l.b16 %v567
        %v664 = vunpack.c.h.b16 %v567
        %v665 = vunpack.c.l.b16 %v568
        %v666 = vunpack.c.h.b16 %v568
        %v667 = vunpack.c.l.b16 %v569
        %v668 = vunpack.c.h.b16 %v569
        %v669 = vunpack.c.l.b16 %v570
        %v670 = vunpack.c.h.b16 %v570
        %v671 = vunpack.c.l.b16 %v571
        %v672 = vunpack.c.h.b16 %v571
        %v673 = vunpack.c.l.b16 %v572
        %v674 = vunpack.c.h.b16 %v572
        %v675 = vunpack.c.l.b16 %v573
        %v676 = vunpack.c.h.b16 %v573
        %v677 = vunpack.c.l.b16 %v574
        %v678 = vunpack.c.h.b16 %v574
        %v679 = vunpack.c.l.b16 %v575
        %v680 = vunpack.c.h.b16 %v575
        %v681 = vunpack.c.l.b16 %v576
        %v682 = vunpack.c.h.b16 %v576
        %v683 = vunpack.c.l.b16 %v577
        %v684 = vunpack.c.h.b16 %v577
        %v685 = vunpack.c.l.b16 %v578
        %v686 = vunpack.c.h.b16 %v578
        %v687 = vpack.c.b16 %v625, %v623
        %v688 = vpack.c.b16 %v626, %v624
        %v689 = vpack.c.b16 %v629, %v627
        %v690 = vpack.c.b16 %v630, %v628
        %v691 = vpack.c.b16 %v633, %v631
        %v692 = vpack.c.b16 %v634, %v632
        %v693 = vpack.c.b16 %v637, %v635
        %v694 = vpack.c.b16 %v638, %v636
        %v695 = vpack.c.b16 %v641, %v639
        %v696 = vpack.c.b16 %v642, %v640
        %v697 = vpack.c.b16 %v645, %v643
        %v698 = vpack.c.b16 %v646, %v644
        %v699 = vpack.c.b16 %v649, %v647
        %v700 = vpack.c.b16 %v650, %v648
        %v701 = vpack.c.b16 %v653, %v651
        %v702 = vpack.c.b16 %v654, %v652
        %v703 = vpack.c.b16 %v657, %v655
        %v704 = vpack.c.b16 %v658, %v656
        %v705 = vpack.c.b16 %v661, %v659
        %v706 = vpack.c.b16 %v662, %v660
        %v707 = vpack.c.b16 %v665, %v663
        %v708 = vpack.c.b16 %v666, %v664
        %v709 = vpack.c.b16 %v669, %v667
        %v710 = vpack.c.b16 %v670, %v668
        %v711 = vpack.c.b16 %v673, %v671
        %v712 = vpack.c.b16 %v674, %v672
        %v713 = vpack.c.b16 %v677, %v675
        %v714 = vpack.c.b16 %v678, %v676
        %v715 = vpack.c.b16 %v681, %v679
        %v716 = vpack.c.b16 %v682, %v680
        %v717 = vpack.c.b16 %v685, %v683
        %v718 = vpack.c.b16 %v686, %v684
        %751 = vmatprep.subr.bf16.mxu0 %v688
        %752 = vmatpush1.bf16.msra.mxu0 %v687
        %753 = vmatprep.subr.bf16.mxu0 %v690
        %754 = vmatpush1.bf16.msra.mxu0 %v689
        %755 = vmatprep.subr.bf16.mxu0 %v692
        %756 = vmatpush1.bf16.msra.mxu0 %v691
        %757 = vmatprep.subr.bf16.mxu0 %v694
        %758 = vmatpush1.bf16.msra.mxu0 %v693
        %759 = vmatprep.subr.bf16.mxu0 %v696
        %760 = vmatpush1.bf16.msra.mxu0 %v695
        %761 = vmatprep.subr.bf16.mxu0 %v698
        %762 = vmatpush1.bf16.msra.mxu0 %v697
        %763 = vmatprep.subr.bf16.mxu0 %v700
        %764 = vmatpush1.bf16.msra.mxu0 %v699
        %765 = vmatprep.subr.bf16.mxu0 %v702
        %766 = vmatpush1.bf16.msra.mxu0 %v701
        %767 = vmatprep.subr.bf16.mxu0 %v704
        %768 = vmatpush1.bf16.msra.mxu0 %v703
        %769 = vmatprep.subr.bf16.mxu0 %v706
        %770 = vmatpush1.bf16.msra.mxu0 %v705
        %771 = vmatprep.subr.bf16.mxu0 %v708
        %772 = vmatpush1.bf16.msra.mxu0 %v707
        %773 = vmatprep.subr.bf16.mxu0 %v710
        %774 = vmatpush1.bf16.msra.mxu0 %v709
        %775 = vmatprep.subr.bf16.mxu0 %v712
        %776 = vmatpush1.bf16.msra.mxu0 %v711
        %777 = vmatprep.subr.bf16.mxu0 %v714
        %778 = vmatpush1.bf16.msra.mxu0 %v713
        %779 = vmatprep.subr.bf16.mxu0 %v716
        %780 = vmatpush1.bf16.msra.mxu0 %v715
        %781 = vmatprep.subr.bf16.mxu0 %v718
        %782 = vmatpush1.bf16.msra.mxu0 %v717
        %783 = vmatprep.mubr.bf16.mxu0 %v532
        %784 = vmatmul.mubr.bf16.gmra.mrb[0].mxu0 %v531
        %v785 = vpop.f32.mrb[0].mxu0
        %v786 = vadd.f32 %v584, %v785
        %v787 = vpop.f32.mrb[0].mxu0
        %v788 = vadd.f32 %v588, %v787
        %v789 = vpop.f32.mrb[0].mxu0
        %v790 = vadd.f32 %v584, %v789
        %v791 = vpop.f32.mrb[0].mxu0
        %v792 = vadd.f32 %v588, %v791
        %793 = vmatprep.mubr.bf16.mxu0 %v534
        %794 = vmatmul.mubr.bf16.gmra.mrb[0].mxu0 %v533
        %v795 = vpop.f32.mrb[0].mxu0
        %v796 = vadd.f32 %v584, %v795
        %v797 = vpop.f32.mrb[0].mxu0
        %v798 = vadd.f32 %v588, %v797
        %v799 = vpop.f32.mrb[0].mxu0
        %v800 = vadd.f32 %v584, %v799
        %v801 = vpop.f32.mrb[0].mxu0
        %v802 = vadd.f32 %v588, %v801
        %803 = vmatprep.mubr.bf16.mxu0 %v536
        %804 = vmatmul.mubr.bf16.gmra.mrb[0].mxu0 %v535
        %v805 = vpop.f32.mrb[0].mxu0
        %v806 = vadd.f32 %v584, %v805
        %v807 = vpop.f32.mrb[0].mxu0
        %v808 = vadd.f32 %v588, %v807
        %v809 = vpop.f32.mrb[0].mxu0
        %v810 = vadd.f32 %v584, %v809
        %v811 = vpop.f32.mrb[0].mxu0
        %v812 = vadd.f32 %v588, %v811
        %813 = vmatprep.mubr.bf16.mxu0 %v538
        %814 = vmatmul.mubr.bf16.gmra.mrb[0].mxu0 %v537
        %v815 = vpop.f32.mrb[0].mxu0
        %v816 = vadd.f32 %v584, %v815
        %v817 = vpop.f32.mrb[0].mxu0
        %v818 = vadd.f32 %v588, %v817
        %v819 = vpop.f32.mrb[0].mxu0
        %v820 = vadd.f32 %v584, %v819
        %v821 = vpop.f32.mrb[0].mxu0
        %v822 = vadd.f32 %v588, %v821
        %823 = vmatprep.mubr.bf16.mxu0 %v540
        %824 = vmatmul.mubr.bf16.gmra.mrb[0].mxu0 %v539
        %v825 = vpop.f32.mrb[0].mxu0
        %v826 = vadd.f32 %v584, %v825
        %v827 = vpop.f32.mrb[0].mxu0
        %v828 = vadd.f32 %v588, %v827
        %v829 = vpop.f32.mrb[0].mxu0
        %v830 = vadd.f32 %v584, %v829
        %v831 = vpop.f32.mrb[0].mxu0
        %v832 = vadd.f32 %v588, %v831
        %833 = vmatprep.mubr.bf16.mxu0 %v542
        %834 = vmatmul.mubr.bf16.gmra.mrb[0].mxu0 %v541
        %v835 = vpop.f32.mrb[0].mxu0
        %v836 = vadd.f32 %v584, %v835
        %v837 = vpop.f32.mrb[0].mxu0
        %v838 = vadd.f32 %v588, %v837
        %v839 = vpop.f32.mrb[0].mxu0
        %v840 = vadd.f32 %v584, %v839
        %v841 = vpop.f32.mrb[0].mxu0
        %v842 = vadd.f32 %v588, %v841
        %843 = vmatprep.mubr.bf16.mxu0 %v544
        %844 = vmatmul.mubr.bf16.gmra.mrb[0].mxu0 %v543
        %v845 = vpop.f32.mrb[0].mxu0
        %v846 = vadd.f32 %v584, %v845
        %v847 = vpop.f32.mrb[0].mxu0
        %v848 = vadd.f32 %v588, %v847
        %v849 = vpop.f32.mrb[0].mxu0
        %v850 = vadd.f32 %v584, %v849
        %v851 = vpop.f32.mrb[0].mxu0
        %v852 = vadd.f32 %v588, %v851
        %853 = vmatprep.mubr.bf16.mxu0 %v546
        %854 = vmatmul.mubr.bf16.gmra.mrb[0].mxu0 %v545
        %v855 = vpop.f32.mrb[0].mxu0
        %v856 = vadd.f32 %v584, %v855
        %v857 = vpop.f32.mrb[0].mxu0
        %v858 = vadd.f32 %v588, %v857
        %v859 = vpop.f32.mrb[0].mxu0
        %v860 = vadd.f32 %v584, %v859
        %v861 = vpop.f32.mrb[0].mxu0
        %v862 = vadd.f32 %v588, %v861
        %863 = vdwg.mxu0
        %v864 = vmax.f32 %v786, 0.0
        %v865 = vmax.f32 %v788, 0.0
        %v866 = vmax.f32 %v790, 0.0
        %v867 = vmax.f32 %v792, 0.0
        %v868 = vmax.f32 %v796, 0.0
        %v869 = vmax.f32 %v798, 0.0
        %v870 = vmax.f32 %v800, 0.0
        %v871 = vmax.f32 %v802, 0.0
        %v872 = vmax.f32 %v806, 0.0
        %v873 = vmax.f32 %v808, 0.0
        %v874 = vmax.f32 %v810, 0.0
        %v875 = vmax.f32 %v812, 0.0
        %v876 = vmax.f32 %v816, 0.0
        %v877 = vmax.f32 %v818, 0.0
        %v878 = vmax.f32 %v820, 0.0
        %v879 = vmax.f32 %v822, 0.0
        %v880 = vmax.f32 %v826, 0.0
        %v881 = vmax.f32 %v828, 0.0
        %v882 = vmax.f32 %v830, 0.0
        %v883 = vmax.f32 %v832, 0.0
        %v884 = vmax.f32 %v836, 0.0
        %v885 = vmax.f32 %v838, 0.0
        %v886 = vmax.f32 %v840, 0.0
        %v887 = vmax.f32 %v842, 0.0
        %v888 = vmax.f32 %v846, 0.0
        %v889 = vmax.f32 %v848, 0.0
        %v890 = vmax.f32 %v850, 0.0
        %v891 = vmax.f32 %v852, 0.0
        %v892 = vmax.f32 %v856, 0.0
        %v893 = vmax.f32 %v858, 0.0
        %v894 = vmax.f32 %v860, 0.0
        %v895 = vmax.f32 %v862, 0.0
        %v896 = vpack.c.bf16 %v866, %v864
        %v897 = vpack.c.bf16 %v867, %v865
        %v898 = vpack.c.bf16 %v870, %v868
        %v899 = vpack.c.bf16 %v871, %v869
        %v900 = vpack.c.bf16 %v874, %v872
        %v901 = vpack.c.bf16 %v875, %v873
        %v902 = vpack.c.bf16 %v878, %v876
        %v903 = vpack.c.bf16 %v879, %v877
        %v904 = vpack.c.bf16 %v882, %v880
        %v905 = vpack.c.bf16 %v883, %v881
        %v906 = vpack.c.bf16 %v886, %v884
        %v907 = vpack.c.bf16 %v887, %v885
        %v908 = vpack.c.bf16 %v890, %v888
        %v909 = vpack.c.bf16 %v891, %v889
        %v910 = vpack.c.bf16 %v894, %v892
        %v911 = vpack.c.bf16 %v895, %v893
        %v912 = vld [vmem:[%s5] sm:$0xf]
        %v913 = vld [vmem:[%s5 + $0x4] sm:$0xf]
        %v914 = vld [vmem:[%s5 + $0x8] sm:$0xf]
        %v915 = vld [vmem:[%s5 + $0xc] sm:$0xf]
        %v916 = vld [vmem:[%s5 + $0x10] sm:$0xf]
        %v917 = vld [vmem:[%s5 + $0x14] sm:$0xf]
        %v918 = vld [vmem:[%s5 + $0x18] sm:$0xf]
        %v919 = vld [vmem:[%s5 + $0x1c] sm:$0xf]
        %v920 = vld [vmem:[%s5 + $0x20] sm:$0xf]
        %v921 = vld [vmem:[%s5 + $0x24] sm:$0xf]
        %v922 = vld [vmem:[%s5 + $0x28] sm:$0xf]
        %v923 = vld [vmem:[%s5 + $0x2c] sm:$0xf]
        %v924 = vld [vmem:[%s5 + $0x30] sm:$0xf]
        %v925 = vld [vmem:[%s5 + $0x34] sm:$0xf]
        %v926 = vld [vmem:[%s5 + $0x38] sm:$0xf]
        %v927 = vld [vmem:[%s5 + $0x3c] sm:$0xf]
        %v928 = vld [vmem:[%s5 + $0x40] sm:$0xf]
        %v929 = vld [vmem:[%s5 + $0x44] sm:$0xf]
        %v930 = vld [vmem:[%s5 + $0x48] sm:$0xf]
        %v931 = vld [vmem:[%s5 + $0x4c] sm:$0xf]
        %v932 = vld [vmem:[%s5 + $0x50] sm:$0xf]
        %v933 = vld [vmem:[%s5 + $0x54] sm:$0xf]
        %v934 = vld [vmem:[%s5 + $0x58] sm:$0xf]
        %v935 = vld [vmem:[%s5 + $0x5c] sm:$0xf]
        %v936 = vld [vmem:[%s5 + $0x60] sm:$0xf]
        %v937 = vld [vmem:[%s5 + $0x64] sm:$0xf]
        %v938 = vld [vmem:[%s5 + $0x68] sm:$0xf]
        %v939 = vld [vmem:[%s5 + $0x6c] sm:$0xf]
        %v940 = vld [vmem:[%s5 + $0x70] sm:$0xf]
        %v941 = vld [vmem:[%s5 + $0x74] sm:$0xf]
        %v942 = vld [vmem:[%s5 + $0x78] sm:$0xf]
        %v943 = vld [vmem:[%s5 + $0x7c] sm:$0xf]
        %v944 = vld [vmem:[%s6] sm:$0x1]
        %v946 = vlaneseq
        %v947 = vshrl.u32 %v946, 7
        %v948 = vsub.s32 0, %v947
        %v949 = vrot.slane %v944, %v948
        %v983 = vunpack.c.l.b16 %v912
        %v984 = vunpack.c.l.b16 %v913
        %v985 = vunpack.c.l.b16 %v914
        %v986 = vunpack.c.l.b16 %v915
        %v987 = vunpack.c.l.b16 %v916
        %v988 = vunpack.c.l.b16 %v917
        %v989 = vunpack.c.l.b16 %v918
        %v990 = vunpack.c.l.b16 %v919
        %v991 = vunpack.c.l.b16 %v920
        %v992 = vunpack.c.l.b16 %v921
        %v993 = vunpack.c.l.b16 %v922
        %v994 = vunpack.c.l.b16 %v923
        %v995 = vunpack.c.l.b16 %v924
        %v996 = vunpack.c.l.b16 %v925
        %v997 = vunpack.c.l.b16 %v926
        %v998 = vunpack.c.l.b16 %v927
        %v999 = vunpack.c.l.b16 %v928
        %v1000 = vunpack.c.l.b16 %v929
        %v1001 = vunpack.c.l.b16 %v930
        %v1002 = vunpack.c.l.b16 %v931
        %v1003 = vunpack.c.l.b16 %v932
        %v1004 = vunpack.c.l.b16 %v933
        %v1005 = vunpack.c.l.b16 %v934
        %v1006 = vunpack.c.l.b16 %v935
        %v1007 = vunpack.c.l.b16 %v936
        %v1008 = vunpack.c.l.b16 %v937
        %v1009 = vunpack.c.l.b16 %v938
        %v1010 = vunpack.c.l.b16 %v939
        %v1011 = vunpack.c.l.b16 %v940
        %v1012 = vunpack.c.l.b16 %v941
        %v1013 = vunpack.c.l.b16 %v942
        %v1014 = vunpack.c.l.b16 %v943
        %v1015 = vpack.c.b16 %v984, %v983
        %v1016 = vpack.c.b16 %v986, %v985
        %v1017 = vpack.c.b16 %v988, %v987
        %v1018 = vpack.c.b16 %v990, %v989
        %v1019 = vpack.c.b16 %v992, %v991
        %v1020 = vpack.c.b16 %v994, %v993
        %v1021 = vpack.c.b16 %v996, %v995
        %v1022 = vpack.c.b16 %v998, %v997
        %v1023 = vpack.c.b16 %v1000, %v999
        %v1024 = vpack.c.b16 %v1002, %v1001
        %v1025 = vpack.c.b16 %v1004, %v1003
        %v1026 = vpack.c.b16 %v1006, %v1005
        %v1027 = vpack.c.b16 %v1008, %v1007
        %v1028 = vpack.c.b16 %v1010, %v1009
        %v1029 = vpack.c.b16 %v1012, %v1011
        %v1030 = vpack.c.b16 %v1014, %v1013
        %1047 = vmatprep.subr.bf16.mxu0 0
        %1048 = vmatpush1.bf16.msra.mxu0 %v1015
        %1049 = vmatprep.subr.bf16.mxu0 0
        %1050 = vmatpush1.bf16.msra.mxu0 %v1016
        %1051 = vmatprep.subr.bf16.mxu0 0
        %1052 = vmatpush1.bf16.msra.mxu0 %v1017
        %1053 = vmatprep.subr.bf16.mxu0 0
        %1054 = vmatpush1.bf16.msra.mxu0 %v1018
        %1055 = vmatprep.subr.bf16.mxu0 0
        %1056 = vmatpush1.bf16.msra.mxu0 %v1019
        %1057 = vmatprep.subr.bf16.mxu0 0
        %1058 = vmatpush1.bf16.msra.mxu0 %v1020
        %1059 = vmatprep.subr.bf16.mxu0 0
        %1060 = vmatpush1.bf16.msra.mxu0 %v1021
        %1061 = vmatprep.subr.bf16.mxu0 0
        %1062 = vmatpush1.bf16.msra.mxu0 %v1022
        %1063 = vmatprep.subr.bf16.mxu0 0
        %1064 = vmatpush1.bf16.msra.mxu0 %v1023
        %1065 = vmatprep.subr.bf16.mxu0 0
        %1066 = vmatpush1.bf16.msra.mxu0 %v1024
        %1067 = vmatprep.subr.bf16.mxu0 0
        %1068 = vmatpush1.bf16.msra.mxu0 %v1025
        %1069 = vmatprep.subr.bf16.mxu0 0
        %1070 = vmatpush1.bf16.msra.mxu0 %v1026
        %1071 = vmatprep.subr.bf16.mxu0 0
        %1072 = vmatpush1.bf16.msra.mxu0 %v1027
        %1073 = vmatprep.subr.bf16.mxu0 0
        %1074 = vmatpush1.bf16.msra.mxu0 %v1028
        %1075 = vmatprep.subr.bf16.mxu0 0
        %1076 = vmatpush1.bf16.msra.mxu0 %v1029
        %1077 = vmatprep.subr.bf16.mxu0 0
        %1078 = vmatpush1.bf16.msra.mxu0 %v1030
        %1079 = vmatprep.mubr.bf16.mxu0 %v897
        %1080 = vmatmul.mubr.bf16.gmra.mrb[0].mxu0 %v896
        %v1081 = vpop.f32.mrb[0].mxu0
        %v1082 = vadd.f32 %v949, %v1081
        %v1083 = vpop.f32.mrb[0].mxu0
        %v1084 = vpop.f32.mrb[0].mxu0
        %v1085 = vadd.f32 %v949, %v1084
        %v1086 = vpop.f32.mrb[0].mxu0
        %1087 = vmatprep.mubr.bf16.mxu0 %v899
        %1088 = vmatmul.mubr.bf16.gmra.mrb[0].mxu0 %v898
        %v1089 = vpop.f32.mrb[0].mxu0
        %v1090 = vadd.f32 %v949, %v1089
        %v1091 = vpop.f32.mrb[0].mxu0
        %v1092 = vpop.f32.mrb[0].mxu0
        %v1093 = vadd.f32 %v949, %v1092
        %v1094 = vpop.f32.mrb[0].mxu0
        %1095 = vmatprep.mubr.bf16.mxu0 %v901
        %1096 = vmatmul.mubr.bf16.gmra.mrb[0].mxu0 %v900
        %v1097 = vpop.f32.mrb[0].mxu0
        %v1098 = vadd.f32 %v949, %v1097
        %v1099 = vpop.f32.mrb[0].mxu0
        %v1100 = vpop.f32.mrb[0].mxu0
        %v1101 = vadd.f32 %v949, %v1100
        %v1102 = vpop.f32.mrb[0].mxu0
        %1103 = vmatprep.mubr.bf16.mxu0 %v903
        %1104 = vmatmul.mubr.bf16.gmra.mrb[0].mxu0 %v902
        %v1105 = vpop.f32.mrb[0].mxu0
        %v1106 = vadd.f32 %v949, %v1105
        %v1107 = vpop.f32.mrb[0].mxu0
        %v1108 = vpop.f32.mrb[0].mxu0
        %v1109 = vadd.f32 %v949, %v1108
        %v1110 = vpop.f32.mrb[0].mxu0
        %1111 = vmatprep.mubr.bf16.mxu0 %v905
        %1112 = vmatmul.mubr.bf16.gmra.mrb[0].mxu0 %v904
        %v1113 = vpop.f32.mrb[0].mxu0
        %v1114 = vadd.f32 %v949, %v1113
        %v1115 = vpop.f32.mrb[0].mxu0
        %v1116 = vpop.f32.mrb[0].mxu0
        %v1117 = vadd.f32 %v949, %v1116
        %v1118 = vpop.f32.mrb[0].mxu0
        %1119 = vmatprep.mubr.bf16.mxu0 %v907
        %1120 = vmatmul.mubr.bf16.gmra.mrb[0].mxu0 %v906
        %v1121 = vpop.f32.mrb[0].mxu0
        %v1122 = vadd.f32 %v949, %v1121
        %v1123 = vpop.f32.mrb[0].mxu0
        %v1124 = vpop.f32.mrb[0].mxu0
        %v1125 = vadd.f32 %v949, %v1124
        %v1126 = vpop.f32.mrb[0].mxu0
        %1127 = vmatprep.mubr.bf16.mxu0 %v909
        %1128 = vmatmul.mubr.bf16.gmra.mrb[0].mxu0 %v908
        %v1129 = vpop.f32.mrb[0].mxu0
        %v1130 = vadd.f32 %v949, %v1129
        %v1131 = vpop.f32.mrb[0].mxu0
        %v1132 = vpop.f32.mrb[0].mxu0
        %v1133 = vadd.f32 %v949, %v1132
        %v1134 = vpop.f32.mrb[0].mxu0
        %1135 = vmatprep.mubr.bf16.mxu0 %v911
        %1136 = vmatmul.mubr.bf16.gmra.mrb[0].mxu0 %v910
        %v1137 = vpop.f32.mrb[0].mxu0
        %v1138 = vadd.f32 %v949, %v1137
        %v1139 = vpop.f32.mrb[0].mxu0
        %v1140 = vpop.f32.mrb[0].mxu0
        %v1141 = vadd.f32 %v949, %v1140
        %v1142 = vpop.f32.mrb[0].mxu0
        %1143 = vdwg.mxu0
        %vm1144 = vcmask 64512
        %1145 = vst.msk [vmem:[%s280] sm:$0xff] %vm1144, %v1082
        %1146 = vst.msk [vmem:[%s280 + $0x8] sm:$0xff] %vm1144, %v1085
        %1147 = vst.msk [vmem:[%s280 + $0x10] sm:$0xff] %vm1144, %v1090
        %1148 = vst.msk [vmem:[%s280 + $0x18] sm:$0xff] %vm1144, %v1093
        %1149 = vst.msk [vmem:[%s280 + $0x20] sm:$0xff] %vm1144, %v1098
        %1150 = vst.msk [vmem:[%s280 + $0x28] sm:$0xff] %vm1144, %v1101
        %1151 = vst.msk [vmem:[%s280 + $0x30] sm:$0xff] %vm1144, %v1106
        %1152 = vst.msk [vmem:[%s280 + $0x38] sm:$0xff] %vm1144, %v1109
        %1153 = vst.msk [vmem:[%s280 + $0x40] sm:$0xff] %vm1144, %v1114
        %1154 = vst.msk [vmem:[%s280 + $0x48] sm:$0xff] %vm1144, %v1117
        %1155 = vst.msk [vmem:[%s280 + $0x50] sm:$0xff] %vm1144, %v1122
        %1156 = vst.msk [vmem:[%s280 + $0x58] sm:$0xff] %vm1144, %v1125
        %1157 = vst.msk [vmem:[%s280 + $0x60] sm:$0xff] %vm1144, %v1130
        %1158 = vst.msk [vmem:[%s280 + $0x68] sm:$0xff] %vm1144, %v1133
        %1159 = vst.msk [vmem:[%s280 + $0x70] sm:$0xff] %vm1144, %v1138
        %1160 = vst.msk [vmem:[%s280 + $0x78] sm:$0xff] %vm1144, %v1141
        %s1161 = sand.u32 %s178, 1
        %s1162 = sand.u32 %s178, 1
        %s1163 = smul.addr %s1162, 128
        %s1164 = scalar_lea.vmem [#allocation2], %s1163
        // Predicated region
        $region49: #{discriminator_forward.1} parent=47 // pred_check
          %p1165 = pneg %p188
        $region50: #{discriminator_forward.1} parent=47 // pred_check_branch
          %1167 = sbr.rel (%p1165) target = $region52
        $region51: #{discriminator_forward.1} parent=47 // pred_region
          %s1168 = smul.u32 16, %s18
          %s1169 = ssub.s32 38, %s1168
          %p1170 = scmp.lt.s32.totalorder %s1169, 16
          %s1171 = scalar_select %p1170, %s1169, 16
          %s1172 = smul.u32 128, %s1171
          %p1173 = scmp.ne.s32.totalorder 0, %s1172
          %s1174 = smul.addr %s1168, 8
          %s1175 = scalar_lea.vmem %s7, %s1174
          // Predicated region
          $region53: #{discriminator_forward.1} parent=51 // pred_check
            %p1176 = pneg %p1173
          $region54: #{discriminator_forward.1} parent=51 // pred_check_branch
            %1178 = sbr.rel (%p1176) target = $region56
          $region55: #{discriminator_forward.1} parent=51 // pred_region
            // Predicated region
            $region57: #{discriminator_forward.1} parent=55 // pred_check
              _
            $region58: #{discriminator_forward.1} parent=55 // pred_check_branch
              %1180 = sbr.rel (0) target = $region60
            $region59: #{discriminator_forward.1} parent=55 // pred_region
              // Predicated region
              $region79: #{discriminator_forward.1} parent=59 // pred_check
                _
              $region80: #{discriminator_forward.1} parent=59 // pred_check_branch
                %1259 = sbr.rel (0) target = $region82
              $region81: #{discriminator_forward.1} parent=59 // pred_region
                %s1260 = sshrl.u32 %s1171, 4
                // While loop
                $region83: #{discriminator_forward.1} parent=81 // loop_pre_header
                  _
                $region84: #{discriminator_forward.1} parent=81 // loop_header
                  %s1262 = sphi 0, %s1264
                  %p1263 = scmp.ge.s32.totalorder %s1262, %s1260
                  %s1267 = sphi 0, %s1304
                  %s1268 = sphi %s1164, %s1307
                  %s1269 = sphi %s1175, %s1308
                $region85: #{discriminator_forward.1} parent=81 // loop_header_branch
                  %1266 = sbr.rel (%p1263) target = $region89
                $region86: #{discriminator_forward.1} parent=81 // loop_body
                  %v1270 = vld [vmem:[%s1268] sm:$0xff]
                  %1271 = vst [vmem:[%s1269] sm:$0xff] %v1270
                  %v1272 = vld [vmem:[%s1268 + $0x8] sm:$0xff]
                  %1273 = vst [vmem:[%s1269 + $0x8] sm:$0xff] %v1272
                  %v1274 = vld [vmem:[%s1268 + $0x10] sm:$0xff]
                  %1275 = vst [vmem:[%s1269 + $0x10] sm:$0xff] %v1274
                  %v1276 = vld [vmem:[%s1268 + $0x18] sm:$0xff]
                  %1277 = vst [vmem:[%s1269 + $0x18] sm:$0xff] %v1276
                  %v1278 = vld [vmem:[%s1268 + $0x20] sm:$0xff]
                  %1279 = vst [vmem:[%s1269 + $0x20] sm:$0xff] %v1278
                  %v1280 = vld [vmem:[%s1268 + $0x28] sm:$0xff]
                  %1281 = vst [vmem:[%s1269 + $0x28] sm:$0xff] %v1280
                  %v1282 = vld [vmem:[%s1268 + $0x30] sm:$0xff]
                  %1283 = vst [vmem:[%s1269 + $0x30] sm:$0xff] %v1282
                  %v1284 = vld [vmem:[%s1268 + $0x38] sm:$0xff]
                  %1285 = vst [vmem:[%s1269 + $0x38] sm:$0xff] %v1284
                  %v1286 = vld [vmem:[%s1268 + $0x40] sm:$0xff]
                  %1287 = vst [vmem:[%s1269 + $0x40] sm:$0xff] %v1286
                  %v1288 = vld [vmem:[%s1268 + $0x48] sm:$0xff]
                  %1289 = vst [vmem:[%s1269 + $0x48] sm:$0xff] %v1288
                  %v1290 = vld [vmem:[%s1268 + $0x50] sm:$0xff]
                  %1291 = vst [vmem:[%s1269 + $0x50] sm:$0xff] %v1290
                  %v1292 = vld [vmem:[%s1268 + $0x58] sm:$0xff]
                  %1293 = vst [vmem:[%s1269 + $0x58] sm:$0xff] %v1292
                  %v1294 = vld [vmem:[%s1268 + $0x60] sm:$0xff]
                  %1295 = vst [vmem:[%s1269 + $0x60] sm:$0xff] %v1294
                  %v1296 = vld [vmem:[%s1268 + $0x68] sm:$0xff]
                  %1297 = vst [vmem:[%s1269 + $0x68] sm:$0xff] %v1296
                  %v1298 = vld [vmem:[%s1268 + $0x70] sm:$0xff]
                  %1299 = vst [vmem:[%s1269 + $0x70] sm:$0xff] %v1298
                  %v1300 = vld [vmem:[%s1268 + $0x78] sm:$0xff]
                  %1301 = vst [vmem:[%s1269 + $0x78] sm:$0xff] %v1300
                  %s1302 = sadd.s32 1, %s1267
                  %p1303 = scmp.ge.s32.totalorder %s1302, %s1260
                  %s1304 = scalar_select %p1303, 0, %s1302
                  %s1305 = smul.u32 %s1304, 128
                  %s1306 = smul.u32 %s1304, 128
                  %s1307 = scalar_lea.vmem %s1164, %s1305 [#allocation2]
                  %s1308 = scalar_lea.vmem %s1175, %s1306
                $region87: #{discriminator_forward.1} parent=81 // loop_footer
                  %s1264 = sadd.s32 %s1262, 1
                $region88: #{discriminator_forward.1} parent=81 // loop_footer_branch
                  %1261 = sbr.rel target = $region84
                $region89: #{discriminator_forward.1} parent=81 // loop_exit
                  _
                %s1309 = sshrl.u32 %s1171, 4
                %s1310 = sand.u32 %s1171, 15
                %s1311 = smul.u32 %s1309, 16
                %s1312 = smul.u32 8, %s1311
                %s1313 = scalar_lea.vmem %s1164, %s1312 [#allocation2]
                %s1314 = smul.u32 8, %s1311
                %s1315 = scalar_lea.vmem %s1175, %s1314
                // While loop
                $region90: #{discriminator_forward.1} parent=81 // loop_pre_header
                  _
                $region91: #{discriminator_forward.1} parent=81 // loop_header
                  %s1317 = sphi 0, %s1319
                  %p1318 = scmp.ge.s32.totalorder %s1317, %s1310
                  %s1322 = sphi 0, %s1329
                  %s1323 = sphi %s1313, %s1332
                  %s1324 = sphi %s1315, %s1333
                $region92: #{discriminator_forward.1} parent=81 // loop_header_branch
                  %1321 = sbr.rel (%p1318) target = $region96
                $region93: #{discriminator_forward.1} parent=81 // loop_body
                  %v1325 = vld [vmem:[%s1323] sm:$0xff]
                  %1326 = vst [vmem:[%s1324] sm:$0xff] %v1325
                  %s1327 = sadd.s32 1, %s1322
                  %p1328 = scmp.ge.s32.totalorder %s1327, %s1310
                  %s1329 = scalar_select %p1328, 0, %s1327
                  %s1330 = smul.u32 %s1329, 8
                  %s1331 = smul.u32 %s1329, 8
                  %s1332 = scalar_lea.vmem %s1313, %s1330 [#allocation2]
                  %s1333 = scalar_lea.vmem %s1315, %s1331
                $region94: #{discriminator_forward.1} parent=81 // loop_footer
                  %s1319 = sadd.s32 %s1317, 1
                $region95: #{discriminator_forward.1} parent=81 // loop_footer_branch
                  %1316 = sbr.rel target = $region91
                $region96: #{discriminator_forward.1} parent=81 // loop_exit
                  _
              $region82: #{discriminator_forward.1} parent=59 // pred_fallthru
                _
              // Predicated region
              $region97: #{discriminator_forward.1} parent=59 // pred_check
                _
              $region98: #{discriminator_forward.1} parent=59 // pred_check_branch
                %1335 = sbr.rel target = $region100
              $region99: #{discriminator_forward.1} parent=59 // pred_region
                _
              $region100: #{discriminator_forward.1} parent=59 // pred_fallthru
                _
            $region60: #{discriminator_forward.1} parent=55 // pred_fallthru
              _
            // Predicated region
            $region61: #{discriminator_forward.1} parent=55 // pred_check
              _
            $region62: #{discriminator_forward.1} parent=55 // pred_check_branch
              %1182 = sbr.rel target = $region64
            $region63: #{discriminator_forward.1} parent=55 // pred_region
              %s1184 = sshrl.u32 %s1171, 4
              // While loop
              $region65: #{discriminator_forward.1} parent=63 // loop_pre_header
                _
              $region66: #{discriminator_forward.1} parent=63 // loop_header
                %s1186 = sphi 0, %s1188
                %p1187 = scmp.ge.s32.totalorder %s1186, %s1184
                %s1191 = sphi 0, %s1228
                %s1192 = sphi %s1164, %s1231
                %s1193 = sphi %s1175, %s1232
              $region67: #{discriminator_forward.1} parent=63 // loop_header_branch
                %1190 = sbr.rel (%p1187) target = $region71
              $region68: #{discriminator_forward.1} parent=63 // loop_body
                %v1194 = vld [vmem:[%s1192] sm:$0xff]
                %1195 = vst [vmem:[%s1193] sm:$0xff] %v1194
                %v1196 = vld [vmem:[%s1192 + $0x8] sm:$0xff]
                %1197 = vst [vmem:[%s1193 + $0x8] sm:$0xff] %v1196
                %v1198 = vld [vmem:[%s1192 + $0x10] sm:$0xff]
                %1199 = vst [vmem:[%s1193 + $0x10] sm:$0xff] %v1198
                %v1200 = vld [vmem:[%s1192 + $0x18] sm:$0xff]
                %1201 = vst [vmem:[%s1193 + $0x18] sm:$0xff] %v1200
                %v1202 = vld [vmem:[%s1192 + $0x20] sm:$0xff]
                %1203 = vst [vmem:[%s1193 + $0x20] sm:$0xff] %v1202
                %v1204 = vld [vmem:[%s1192 + $0x28] sm:$0xff]
                %1205 = vst [vmem:[%s1193 + $0x28] sm:$0xff] %v1204
                %v1206 = vld [vmem:[%s1192 + $0x30] sm:$0xff]
                %1207 = vst [vmem:[%s1193 + $0x30] sm:$0xff] %v1206
                %v1208 = vld [vmem:[%s1192 + $0x38] sm:$0xff]
                %1209 = vst [vmem:[%s1193 + $0x38] sm:$0xff] %v1208
                %v1210 = vld [vmem:[%s1192 + $0x40] sm:$0xff]
                %1211 = vst [vmem:[%s1193 + $0x40] sm:$0xff] %v1210
                %v1212 = vld [vmem:[%s1192 + $0x48] sm:$0xff]
                %1213 = vst [vmem:[%s1193 + $0x48] sm:$0xff] %v1212
                %v1214 = vld [vmem:[%s1192 + $0x50] sm:$0xff]
                %1215 = vst [vmem:[%s1193 + $0x50] sm:$0xff] %v1214
                %v1216 = vld [vmem:[%s1192 + $0x58] sm:$0xff]
                %1217 = vst [vmem:[%s1193 + $0x58] sm:$0xff] %v1216
                %v1218 = vld [vmem:[%s1192 + $0x60] sm:$0xff]
                %1219 = vst [vmem:[%s1193 + $0x60] sm:$0xff] %v1218
                %v1220 = vld [vmem:[%s1192 + $0x68] sm:$0xff]
                %1221 = vst [vmem:[%s1193 + $0x68] sm:$0xff] %v1220
                %v1222 = vld [vmem:[%s1192 + $0x70] sm:$0xff]
                %1223 = vst [vmem:[%s1193 + $0x70] sm:$0xff] %v1222
                %v1224 = vld [vmem:[%s1192 + $0x78] sm:$0xff]
                %1225 = vst [vmem:[%s1193 + $0x78] sm:$0xff] %v1224
                %s1226 = sadd.s32 1, %s1191
                %p1227 = scmp.ge.s32.totalorder %s1226, %s1184
                %s1228 = scalar_select %p1227, 0, %s1226
                %s1229 = smul.u32 %s1228, 128
                %s1230 = smul.u32 %s1228, 128
                %s1231 = scalar_lea.vmem %s1164, %s1229 [#allocation2]
                %s1232 = scalar_lea.vmem %s1175, %s1230
              $region69: #{discriminator_forward.1} parent=63 // loop_footer
                %s1188 = sadd.s32 %s1186, 1
              $region70: #{discriminator_forward.1} parent=63 // loop_footer_branch
                %1185 = sbr.rel target = $region66
              $region71: #{discriminator_forward.1} parent=63 // loop_exit
                _
              %s1233 = sshrl.u32 %s1171, 4
              %s1234 = sand.u32 %s1171, 15
              %s1235 = smul.u32 %s1233, 16
              %s1236 = smul.u32 8, %s1235
              %s1237 = scalar_lea.vmem %s1164, %s1236 [#allocation2]
              %s1238 = smul.u32 8, %s1235
              %s1239 = scalar_lea.vmem %s1175, %s1238
              // While loop
              $region72: #{discriminator_forward.1} parent=63 // loop_pre_header
                _
              $region73: #{discriminator_forward.1} parent=63 // loop_header
                %s1241 = sphi 0, %s1243
                %p1242 = scmp.ge.s32.totalorder %s1241, %s1234
                %s1246 = sphi 0, %s1253
                %s1247 = sphi %s1237, %s1256
                %s1248 = sphi %s1239, %s1257
              $region74: #{discriminator_forward.1} parent=63 // loop_header_branch
                %1245 = sbr.rel (%p1242) target = $region78
              $region75: #{discriminator_forward.1} parent=63 // loop_body
                %v1249 = vld [vmem:[%s1247] sm:$0xff]
                %1250 = vst [vmem:[%s1248] sm:$0xff] %v1249
                %s1251 = sadd.s32 1, %s1246
                %p1252 = scmp.ge.s32.totalorder %s1251, %s1234
                %s1253 = scalar_select %p1252, 0, %s1251
                %s1254 = smul.u32 %s1253, 8
                %s1255 = smul.u32 %s1253, 8
                %s1256 = scalar_lea.vmem %s1237, %s1254 [#allocation2]
                %s1257 = scalar_lea.vmem %s1239, %s1255
              $region76: #{discriminator_forward.1} parent=63 // loop_footer
                %s1243 = sadd.s32 %s1241, 1
              $region77: #{discriminator_forward.1} parent=63 // loop_footer_branch
                %1240 = sbr.rel target = $region73
              $region78: #{discriminator_forward.1} parent=63 // loop_exit
                _
            $region64: #{discriminator_forward.1} parent=55 // pred_fallthru
              _
          $region56: #{discriminator_forward.1} parent=51 // pred_fallthru
            _
          %1336 = vnop
        $region52: #{discriminator_forward.1} parent=47 // pred_fallthru
          _
      $region48: #{discriminator_forward.1} parent=5 // pred_fallthru
        _
      %p1337 = scmp.le.s32.totalorder 2, %s13
      // Predicated region
      $region101: #{discriminator_forward.1} parent=5 // pred_check
        %p1338 = pneg %p1337
      $region102: #{discriminator_forward.1} parent=5 // pred_check_branch
        %1340 = sbr.rel (%p1338) target = $region104
      $region103: #{discriminator_forward.1} parent=5 // pred_region
        %s1341 = ssub.s32 %s13, 2
        // Predicated region
        $region105: #{discriminator_forward.1} parent=103 // pred_check
          %p1342 = pneg %p194
        $region106: #{discriminator_forward.1} parent=103 // pred_check_branch
          %1344 = sbr.rel (%p1342) target = $region108
        $region107: #{discriminator_forward.1} parent=103 // pred_region
          %s1345 = sand.u32 %s179, 1
          %s1346 = sand.u32 %s179, 1
          %s1347 = smul.addr %s1346, 128
          %s1348 = scalar_lea.vmem [#allocation2], %s1347
        $region108: #{discriminator_forward.1} parent=103 // pred_fallthru
          _
      $region104: #{discriminator_forward.1} parent=5 // pred_fallthru
        _
    $region6: #{discriminator_forward.1} parent=1 // loop_footer
      %s17 = sadd.s32 1, %s13
    $region7: #{discriminator_forward.1} parent=1 // loop_footer_branch
      %12 = sbr.rel target = $region3
    $region8: #{discriminator_forward.1} parent=1 // loop_exit
      _

</llo_original>
